<compile_context>
chip_gen: v7x
topology: tpu7x:2x2x1
jax: 0.10.0
libtpu: 0.0.40
codegen_flags: <defaults>
</compile_context>

<pallas_src>
import functools

import jax
import jax.numpy as jnp
import numpy as np
from jax.experimental import pallas as pl
from jax.experimental.pallas import tpu as pltpu

_VMEM_LIMIT = 48 * 1024 * 1024  # safe on v5e/v6e (128 MiB) and v7x (64 MiB)


# ----------------------- kernel 1: query normalization ----------------------
def _xnorm_kernel(x_ref, xnorm_ref):
    eps = jnp.float32(1e-12)
    # Cast in-kernel (inputs may be bf16); reductions stay in f32.
    x = x_ref[...].astype(jnp.float32)            # (tb, N, C)
    x_mean = jnp.mean(x, axis=1)                  # (tb, C)
    sq = jnp.sum(x_mean * x_mean, axis=1, keepdims=True)
    xnorm_ref[...] = x_mean * jax.lax.rsqrt(jnp.maximum(sq, eps))


def _pick_batch_tile(B, N, C, dtype, budget_bytes=8 * 1024 * 1024):
    """Largest batch tile that (a) divides B, (b) keeps the sublane dim legal
    (multiple of 8 or == B), (c) fits the per-tile VMEM budget (double-buffered
    by the pipeline, so 2x this stays well under the scoped limit on v7x)."""
    itemsize = jnp.dtype(dtype).itemsize
    bytes_per_row = N * C * itemsize
    best = None
    tb = 8
    while tb <= B:
        if B % tb == 0 and tb * bytes_per_row <= budget_bytes:
            best = tb
        tb += 8
    return best if best is not None else B


def query_norm_pallas(x_embed):
    B, N, C = x_embed.shape
    tb = _pick_batch_tile(B, N, C, x_embed.dtype)
    return pl.pallas_call(
        _xnorm_kernel,
        grid=(B // tb,),
        in_specs=[pl.BlockSpec((tb, N, C), lambda i: (i, 0, 0))],
        out_specs=pl.BlockSpec((tb, C), lambda i: (i, 0)),
        out_shape=jax.ShapeDtypeStruct((B, C), jnp.float32),
        compiler_params=pltpu.CompilerParams(
            dimension_semantics=("parallel",),
            vmem_limit_bytes=_VMEM_LIMIT),
    )(x_embed)


# ------------------ kernel 2: key normalization + similarity ----------------
def _keysim_kernel(xnorm_ref, pkey_ref, pnorm_ref, sim_ref):
    eps = jnp.float32(1e-12)
    pk = pkey_ref[...].astype(jnp.float32)        # (P, C)
    sq = jnp.sum(pk * pk, axis=1, keepdims=True)
    p_norm = pk * jax.lax.rsqrt(jnp.maximum(sq, eps))
    pnorm_ref[...] = p_norm
    # Contract last dims directly (no materialized transpose of p_norm).
    sim_ref[...] = jax.lax.dot_general(
        xnorm_ref[...], p_norm, (((1,), (1,)), ((), ())),
        preferred_element_type=jnp.float32)


def key_similarity_pallas(x_embed_norm, prompt_key):
    B, C = x_embed_norm.shape
    P, _ = prompt_key.shape
    # NOTE: (B, P) output has P < 128 lanes -> masked stores, but the tensor is
    # tiny so this is negligible.
    return pl.pallas_call(
        _keysim_kernel,
        grid=(1,),
        in_specs=[pl.BlockSpec((B, C), lambda i: (0, 0)),
                  pl.BlockSpec((P, C), lambda i: (0, 0))],
        out_specs=[pl.BlockSpec((P, C), lambda i: (0, 0)),
                   pl.BlockSpec((B, P), lambda i: (0, 0))],
        out_shape=(jax.ShapeDtypeStruct((P, C), jnp.float32),
                   jax.ShapeDtypeStruct((B, P), jnp.float32)),
    )(x_embed_norm, prompt_key)


# -------------- kernel 3: gather selected prompts + fused concat ------------
def _gather_concat_kernel(idx_ref, pool_ref, pnorm_ref, x_ref,
                          out_ref, selkey_ref, *, top_k, length):
    b = pl.program_id(0)
    n_tokens = x_ref.shape[1]

    # Tail rows: the original embedding (fused torch.cat — no extra HBM pass).
    out_ref[pl.ds(0, 1), pl.ds(top_k * length, n_tokens), :] = (
        x_ref[...].astype(out_ref.dtype))

    # Head rows: top-k prompts gathered from the resident pool.
    for k in range(top_k):
        i = idx_ref[b, k]                                  # SMEM scalar read
        blk = pool_ref[pl.ds(i, 1)]                        # (1, L, C)
        out_ref[pl.ds(0, 1), pl.ds(k * length, length), :] = (
            blk.astype(out_ref.dtype))
        selkey_ref[0, pl.ds(k, 1), :] = pnorm_ref[pl.ds(i, 1), :]


def gather_concat_pallas(idx, prompt, prompt_norm, x_embed):
    B, K = idx.shape
    P, L, C = prompt.shape
    _, N, _ = x_embed.shape
    total = K * L + N
    out_dtype = jnp.promote_types(prompt.dtype, x_embed.dtype)

    kernel = functools.partial(_gather_concat_kernel, top_k=K, length=L)
    grid_spec = pltpu.PrefetchScalarGridSpec(
        num_scalar_prefetch=1,
        grid=(B,),
        in_specs=[
            # whole prompt pool / key table resident in VMEM (tiny)
            pl.BlockSpec((P, L, C), lambda b, idx_ref: (0, 0, 0)),
            pl.BlockSpec((P, C), lambda b, idx_ref: (0, 0)),
            # per-batch x_embed tile
            pl.BlockSpec((1, N, C), lambda b, idx_ref: (b, 0, 0)),
        ],
        out_specs=[
            pl.BlockSpec((1, total, C), lambda b, idx_ref: (b, 0, 0)),
            pl.BlockSpec((1, K, C), lambda b, idx_ref: (b, 0, 0)),
        ],
    )
    prompted, selected_key = pl.pallas_call(
        kernel,
        grid_spec=grid_spec,
        out_shape=(jax.ShapeDtypeStruct((B, total, C), out_dtype),
                   jax.ShapeDtypeStruct((B, K, C), jnp.float32)),
        compiler_params=pltpu.CompilerParams(
            dimension_semantics=("parallel",),   # no shared accumulator -> OK
            vmem_limit_bytes=_VMEM_LIMIT),
    )(idx, prompt, prompt_norm, x_embed)
    return prompted, selected_key


# --------------------------------- forward ----------------------------------
def prompt_forward(x_embed, prompt, prompt_key_param, top_k):
    """Equivalent of Prompt.forward with prompt_pool=True, prompt_key=True,
    embedding_key='mean', prompt_mask=None, batchwise_prompt=False."""
    B, N, C = x_embed.shape
    P, L, _ = prompt.shape

    # Kernel 1: per-batch normalized query (native dtype in, f32 math in-kernel)
    x_embed_norm = query_norm_pallas(x_embed)
    # Kernel 2: normalized keys + cosine similarity
    prompt_norm, similarity = key_similarity_pallas(x_embed_norm,
                                                    prompt_key_param)

    # torch.topk(similarity, k=top_k, dim=1) -> descending-sorted indices
    _, idx = jax.lax.top_k(similarity, top_k)
    idx = idx.astype(jnp.int32)

    # Kernel 3: gather prompts/keys and write prompted_embedding directly
    prompted_embedding, selected_key = gather_concat_pallas(
        idx, prompt, prompt_norm, x_embed)

    # reduce_sim == sum_b sum_k similarity[b, idx[b,k]] / B  (identical math,
    # O(B*K) scalars -> free in JAX; removes the serializing accumulator)
    reduce_sim = jnp.sum(jnp.take_along_axis(similarity, idx, axis=1)) / B

    out = dict()
    out['prompt_norm'] = prompt_norm
    out['x_embed_norm'] = x_embed_norm
    out['similarity'] = similarity
    out['selected_key'] = selected_key
    out['prompt_idx'] = idx
    out['reduce_sim'] = reduce_sim
    out['total_prompt_len'] = top_k * L
    out['prompted_embedding'] = prompted_embedding
    return out


# -------------------------------- reference ---------------------------------
def _ref_forward(x_embed, prompt, prompt_key_param, top_k):
    eps = 1e-12
    B = x_embed.shape[0]
    x_mean = jnp.mean(x_embed, axis=1)
    x_norm = x_mean * jax.lax.rsqrt(
        jnp.maximum(jnp.sum(x_mean ** 2, axis=1, keepdims=True), eps))
    p_norm = prompt_key_param * jax.lax.rsqrt(
        jnp.maximum(jnp.sum(prompt_key_param ** 2, axis=1, keepdims=True), eps))
    sim = x_norm @ p_norm.T
    _, idx = jax.lax.top_k(sim, top_k)
    sel_key = p_norm[idx]
    reduce_sim = jnp.sum(sel_key * x_norm[:, None, :]) / B
    bp = prompt[idx].reshape(B, top_k * prompt.shape[1], prompt.shape[2])
    return sim, idx, sel_key, reduce_sim, jnp.concatenate([bp, x_embed], axis=1)


if __name__ == "__main__":
    # small config consistent with the module
    B, N, C = 2, 8, 32          # batch, tokens, embed_dim
    P, L, K = 8, 5, 2           # pool_size, prompt length, top_k

    key = jax.random.PRNGKey(0)
    k_x, k_prompt, k_key = jax.random.split(key, 3)

    # prompt_init='uniform', prompt_key_init='uniform'
    prompt = jax.random.uniform(k_prompt, (P, L, C), jnp.float32, -1.0, 1.0)
    prompt_key_param = jax.random.uniform(k_key, (P, C), jnp.float32, -1.0, 1.0)
    x_embed = jax.random.normal(k_x, (B, N, C), jnp.float32)

    out = prompt_forward(x_embed, prompt, prompt_key_param, K)
    jax.block_until_ready(out['prompted_embedding'])

    # correctness check against a pure-JAX reference
    sim_r, idx_r, selk_r, rsim_r, pe_r = _ref_forward(
        x_embed, prompt, prompt_key_param, K)
    assert np.allclose(np.asarray(out['similarity']), np.asarray(sim_r),
                       atol=1e-5)
    assert np.array_equal(np.asarray(out['prompt_idx']), np.asarray(idx_r))
    assert np.allclose(np.asarray(out['selected_key']), np.asarray(selk_r),
                       atol=1e-5)
    assert np.allclose(float(out['reduce_sim']), float(rsim_r), atol=1e-5)
    assert np.allclose(np.asarray(out['prompted_embedding']), np.asarray(pe_r),
                       atol=1e-5)
    assert out['total_prompt_len'] == K * L
    assert out['prompted_embedding'].shape == (B, K * L + N, C)

    print("KERNEL_OK")
</pallas_src>

<mosaic_0001>
module attributes {stable_mosaic.version = 11 : i64} {
  func.func @_xnorm_kernel(%arg0: i32, %arg1: memref<2x8x32xf32, #tpu.memory_space<vmem>>, %arg2: memref<2x32xf32, #tpu.memory_space<vmem>>) attributes {dimension_semantics = [#tpu.dimension_semantics<parallel>], iteration_bounds = array<i64: 1>, scalar_prefetch = 0 : i64, scratch_operands = 0 : i64, tpu.core_type = #tpu.core_type<tc>, window_params = [{transform_indices = @transform_0, window_bounds = array<i64: 2, 8, 32>}, {transform_indices = @transform_1, window_bounds = array<i64: 2, 32>}]} {
    %c0 = arith.constant 0 : index
    %c0_0 = arith.constant 0 : index
    %c0_1 = arith.constant 0 : index
    %0 = vector.load %arg1[%c0, %c0_0, %c0_1] : memref<2x8x32xf32, #tpu.memory_space<vmem>>, vector<2x8x32xf32>
    %cst = arith.constant dense<0.000000e+00> : vector<2x32xf32>
    %1 = vector.multi_reduction <add>, %0, %cst [1] : vector<2x8x32xf32> to vector<2x32xf32>
    %cst_2 = arith.constant 8.000000e+00 : f32
    %2 = vector.broadcast %cst_2 : f32 to vector<2x32xf32>
    %3 = arith.divf %1, %2 : vector<2x32xf32>
    %4 = arith.mulf %3, %3 : vector<2x32xf32>
    %cst_3 = arith.constant dense<0.000000e+00> : vector<2xf32>
    %5 = vector.multi_reduction <add>, %4, %cst_3 [1] : vector<2x32xf32> to vector<2xf32>
    %6 = vector.shape_cast %5 : vector<2xf32> to vector<2x1xf32>
    %cst_4 = arith.constant 9.99999996E-13 : f32
    %7 = vector.broadcast %cst_4 : f32 to vector<2x1xf32>
    %8 = arith.maximumf %6, %7 : vector<2x1xf32>
    %9 = math.rsqrt %8 : vector<2x1xf32>
    %10 = vector.broadcast %9 : vector<2x1xf32> to vector<2x32xf32>
    %11 = arith.mulf %3, %10 : vector<2x32xf32>
    %c0_5 = arith.constant 0 : index
    %c0_6 = arith.constant 0 : index
    %12 = vector.load %arg2[%c0_5, %c0_6] : memref<2x32xf32, #tpu.memory_space<vmem>>, vector<2x32xf32>
    tpu.vector_store %arg2[%c0_5, %c0_6], %11 {strides = array<i32>} : memref<2x32xf32, #tpu.memory_space<vmem>>, vector<2x32xf32>,
    return
  }
  func.func @transform_0(%arg0: i32) -> (i32, i32, i32) {
    %c0_i32 = arith.constant 0 : i32
    %c0_i32_0 = arith.constant 0 : i32
    %c0_i32_1 = arith.constant 0 : i32
    return %arg0, %c0_i32, %c0_i32_0 : i32, i32, i32
  }
  func.func @transform_1(%arg0: i32) -> (i32, i32) {
    %c0_i32 = arith.constant 0 : i32
    %c0_i32_0 = arith.constant 0 : i32
    return %arg0, %c0_i32 : i32, i32
  }
}

</mosaic_0001>

<llo_original>
// kernel: tpu_custom_call.1
$region0: #{tpu_custom_call.1}
  #allocation0 [shape = 'u32[]', space=smem, size = 0x4, offset = 0x4, fixed_abs, tag = 'smem constant byte address 0x4 - core index']
  #allocation1 [shape = 'u32[144,128]{1,0:T(1,128)}', space=vmem, size = 0x12000, scoped, tag = 'internal scratch']
  %s0 = inlined_call_operand.hbm [shape: f32[2,8,32], index: 0, kind: input, shape index: {}]
  %s1 = inlined_call_operand.hbm [shape: f32[2,32], index: 1, kind: output, shape index: {}]
  %s2 = sld [smem:[#allocation0]]
  $region18: #{tpu_custom_call.1} parent=0
    _
  %s4 = ssub.s32 1, %s2
  %s5 = scalar_select 0, %s4, %s2
  $region1: #{tpu_custom_call.1} parent=0
    #allocation2 [shape = 'u8[8192]{0}', space=vmem, size = 0x2000, scoped, tag = 'input window, operand 0, single buffered']
    #allocation3 [shape = 's32[1]{0}', space=sflag, size = 0x4, scoped, tag = 'scoped memory for tpu_custom_call.1']
    #allocation4 [shape = 's32[1]{0}', space=sflag, size = 0x4, scoped, tag = 'scoped memory for tpu_custom_call.1']
    #allocation5 [shape = 'u8[1024]{0}', space=vmem, size = 0x400, scoped, tag = 'output window, operand 0, single buffered']
    %6 = vsyncpa [#allocation3], 0
    %7 = vsyncpa [#allocation4], 0
    // Predicated region
    $region2: #{tpu_custom_call.1} parent=1 // pred_check
      _
    $region3: #{tpu_custom_call.1} parent=1 // pred_check_branch
      %9 = sbr.rel (0) target = $region5
    $region4: #{tpu_custom_call.1} parent=1 // pred_region
      %s11 = ssub.s32 256, 256
      %12 = vsyncadd [#allocation3], %s11
      %s13 = sshll.u32 [#allocation2], 4
      %s14 = int_to_ptr.vmem [resolvable:$true] %s13
      %19 = dma.hbm_to_vmem [thread:$0]  %s0, 256, %s14, [#allocation3], 128, 128, 8
    $region5: #{tpu_custom_call.1} parent=1 // pred_fallthru
      _
    // Predicated region
    $region6: #{tpu_custom_call.1} parent=1 // pred_check
      _
    $region7: #{tpu_custom_call.1} parent=1 // pred_check_branch
      %21 = sbr.rel (0) target = $region9
    $region8: #{tpu_custom_call.1} parent=1 // pred_region
      %22 = dma.done [#allocation3], 256
    $region9: #{tpu_custom_call.1} parent=1 // pred_fallthru
      _
    %v23 = vld [vmem:[#allocation2] sm:$0xff]
    %v24 = vld [vmem:[#allocation2 + $0x8] sm:$0xff]
    %vm25 = vcmask 261120
    %v26 = vsel %vm25, %v23, 0.0
    %v27 = vrot.slane %v26, 4
    %v28 = vadd.f32 %v26, %v27
    %v29 = vrot.slane %v28, 2
    %v30 = vadd.f32 %v28, %v29
    %v31 = vrot.slane %v30, 1
    %v32 = vadd.f32 %v30, %v31
    %v33 = vsel %vm25, %v24, 0.0
    %v34 = vrot.slane %v33, 4
    %v35 = vadd.f32 %v33, %v34
    %v36 = vrot.slane %v35, 2
    %v37 = vadd.f32 %v35, %v36
    %v38 = vrot.slane %v37, 1
    %v39 = vadd.f32 %v37, %v38
    %v40 = vrcp.pop 8.0
    %v41 = vmul.f32 %v32, %v40
    %v42 = vmul.f32 %v39, %v40
    %v43 = vmul.f32 %v41, %v41
    %v44 = vmul.f32 %v42, %v42
    %vm47 = vcmask 1041409
    %v48 = vsel %vm47, %v44, %v43
    %vm50 = vcmask 254976
    %v51 = vsel %vm50, %v48, 0.0
    %52 = vadd.xlane.f32.xlu0 %v51
    %v53 = vpop.xlane.xlu0 %52
    %v54 = vmax.f32 %v53, 1e-12
    %v55 = vrsqrt.pop %v54
    %v57 = vrot.slane %v55, 1
    %v60 = vmul.f32 %v41, %v55
    %v61 = vmul.f32 %v42, %v57
    %v64 = vrot.slane %v61, 7
    %v65 = vsel %vm47, %v64, %v60
    %67 = vst.msk [vmem:[#allocation5] sm:$0x3] %vm50, %v65
    // Predicated region
    $region10: #{tpu_custom_call.1} parent=1 // pred_check
      _
    $region11: #{tpu_custom_call.1} parent=1 // pred_check_branch
      %69 = sbr.rel (0) target = $region13
    $region12: #{tpu_custom_call.1} parent=1 // pred_region
      %s71 = ssub.s32 32, 32
      %72 = vsyncadd [#allocation4], %s71
      %s74 = sshll.u32 [#allocation5], 4
      %s75 = int_to_ptr.vmem [resolvable:$true] %s74
      %77 = dma.vmem_to_hbm [thread:$0]  %s75, 32, %s1, [#allocation4]
    $region13: #{tpu_custom_call.1} parent=1 // pred_fallthru
      _
    // Predicated region
    $region14: #{tpu_custom_call.1} parent=1 // pred_check
      _
    $region15: #{tpu_custom_call.1} parent=1 // pred_check_branch
      %79 = sbr.rel (0) target = $region17
    $region16: #{tpu_custom_call.1} parent=1 // pred_region
      %80 = dma.done [#allocation4], 32
    $region17: #{tpu_custom_call.1} parent=1 // pred_fallthru
      _
    %81 = vsyncpa [#allocation3], 1
    %82 = vsyncpa [#allocation4], 1

</llo_original>
